<compile_context>
chip_gen: v5e
topology: v5e:2x2
jax: 0.10.0
libtpu: 0.0.40
codegen_flags: <defaults>
</compile_context>

<pallas_src>
import functools

import jax
import jax.numpy as jnp
from jax import lax
from jax.experimental import pallas as pl
from jax.experimental.pallas import tpu as pltpu


def _infonce_kernel(scale_ref, f1r_ref, f2c_ref, f2r_ref, f1c_ref, out_ref,
                    m1_ref, l1_ref, m2_ref, l2_ref, *, compute_dtype):
    j = pl.program_id(1)
    nj = pl.num_programs(1)

    @pl.when(j == 0)
    def _init():
        neg_inf = jnp.full(m1_ref.shape, -jnp.inf, dtype=jnp.float32)
        zeros = jnp.zeros(l1_ref.shape, dtype=jnp.float32)
        m1_ref[...] = neg_inf
        m2_ref[...] = neg_inf
        l1_ref[...] = zeros
        l2_ref[...] = zeros

    scale = scale_ref[0, 0]

    def _normalize(x_raw, fold_scale):
        # F.normalize(x, dim=-1): x / max(||x||, 1e-12) == x * rsqrt(max(||x||^2, 1e-24))
        x = x_raw.astype(jnp.float32)            # no-op when inputs are already f32
        sumsq = jnp.sum(x * x, axis=-1, keepdims=True)
        inv = lax.rsqrt(jnp.maximum(sumsq, 1e-24))     # EUP, own VLIW slot
        if fold_scale:
            inv = inv * scale                    # fold logit_scale into (bm,1) factor
        return x * inv

    f1r = _normalize(f1r_ref[...], True)     # f1 rows for row-block i, scale folded
    f2c = _normalize(f2c_ref[...], False)    # f2 rows for col-block j
    f2r = _normalize(f2r_ref[...], False)    # f2 rows for row-block i
    f1c = _normalize(f1c_ref[...], True)     # f1 rows for col-block j, scale folded

    dims = (((1,), (1,)), ((), ()))
    # (i, j) tile of logits1 = logit_scale * f1n @ f2n.T
    s1 = lax.dot_general(f1r.astype(compute_dtype), f2c.astype(compute_dtype),
                         dims, preferred_element_type=jnp.float32)
    # (i, j) tile of logits2 = logits1.T == logit_scale * f2n @ f1n.T
    s2 = lax.dot_general(f2r.astype(compute_dtype), f1c.astype(compute_dtype),
                         dims, preferred_element_type=jnp.float32)

    def _online_lse(m_ref, l_ref, s):
        m_prev = m_ref[...]
        m_new = jnp.maximum(m_prev, jnp.max(s, axis=1, keepdims=True))
        l_ref[...] = (l_ref[...] * jnp.exp(m_prev - m_new)
                      + jnp.sum(jnp.exp(s - m_new), axis=1, keepdims=True))
        m_ref[...] = m_new

    _online_lse(m1_ref, l1_ref, s1)
    _online_lse(m2_ref, l2_ref, s2)

    @pl.when(j == nj - 1)
    def _finalize():
        lse1 = m1_ref[...] + jnp.log(l1_ref[...])
        lse2 = m2_ref[...] + jnp.log(l2_ref[...])
        # diag[r] = logit_scale * <f1n[r], f2n[r]>  (scale already folded into f1r)
        diag = jnp.sum(f1r * f2r, axis=-1, keepdims=True)
        ce = (lse1 - diag) + (lse2 - diag)            # per-row CE, both directions
        out_ref[...] = jnp.broadcast_to(ce, out_ref.shape)   # lane-dense store


def _pick_block_rows(batch, d, in_itemsize):
    """Largest MXU-friendly row block that divides `batch` and fits the VMEM budget."""
    budget = 24 * 1024 * 1024
    for bm in (512, 256, 128, 64, 32, 16, 8):
        if batch % bm:
            continue
        est = (8 * bm * d * in_itemsize    # 4 double-buffered input strips
               + 6 * bm * d * 4            # in-kernel normalized / casted copies
               + 2 * bm * bm * 4           # two (bm, bm) f32 logits tiles
               + 2 * bm * 128 * 4          # double-buffered output block
               + 16 * bm)                  # LSE scratch
        if est <= budget:
            return bm
    # TODO(synk): pad/mask ragged batch sizes instead of a single full-size block.
    return batch


def infonce_loss(features1, features2, logit_scale, *,
                 compute_dtype=jnp.bfloat16, block_rows=None):
    """features1, features2: (B, D).  logit_scale: scalar.  Returns scalar f32 loss."""
    b, d = features1.shape
    assert features2.shape == (b, d)
    bm = block_rows if block_rows is not None else _pick_block_rows(
        b, d, jnp.dtype(features1.dtype).itemsize)
    assert b % bm == 0, (b, bm)
    ni = b // bm
    nj = b // bm
    scale_arr = jnp.asarray(logit_scale, dtype=jnp.float32).reshape(1, 1)

    # TODO(synk): add a K (hidden-dim) grid axis and zero-pad D to a multiple of
    # 128 for very large / lane-unaligned hidden sizes.
    kernel = functools.partial(_infonce_kernel, compute_dtype=compute_dtype)

    row_spec = pl.BlockSpec((bm, d), lambda i, j: (i, 0))
    col_spec = pl.BlockSpec((bm, d), lambda i, j: (j, 0))

    partial_ce = pl.pallas_call(
        kernel,
        out_shape=jax.ShapeDtypeStruct((b, 128), jnp.float32),
        grid_spec=pltpu.PrefetchScalarGridSpec(
            num_scalar_prefetch=0,
            grid=(ni, nj),
            in_specs=[
                pl.BlockSpec(memory_space=pltpu.SMEM),  # logit_scale (1,1)
                row_spec,   # f1 rows, block i
                col_spec,   # f2 rows, block j
                row_spec,   # f2 rows, block i
                col_spec,   # f1 rows, block j
            ],
            out_specs=pl.BlockSpec((bm, 128), lambda i, j: (i, 0)),
            scratch_shapes=[pltpu.VMEM((bm, 1), jnp.float32)] * 4,
        ),
        compiler_params=pltpu.CompilerParams(
            dimension_semantics=("parallel", "arbitrary"),
            vmem_limit_bytes=48 * 1024 * 1024,
        ),
    )(scale_arr, features1, features2, features2, features1)

    # partial_ce[r, :] = (lse1[r] - diag[r]) + (lse2[r] - diag[r]), broadcast over lanes.
    return jnp.sum(partial_ce[:, 0]) / (2.0 * b)


def _reference_loss(features1, features2, logit_scale):
    """Pure-JAX reference mirroring the PyTorch module."""
    f1 = features1 / jnp.maximum(
        jnp.linalg.norm(features1, axis=-1, keepdims=True), 1e-12)
    f2 = features2 / jnp.maximum(
        jnp.linalg.norm(features2, axis=-1, keepdims=True), 1e-12)
    logits1 = logit_scale * jnp.dot(f1, f2.T, precision=lax.Precision.HIGHEST)
    logits2 = logits1.T
    labels = jnp.arange(logits1.shape[0])

    def ce(logits):
        lse = jax.scipy.special.logsumexp(logits, axis=1)
        correct = logits[jnp.arange(logits.shape[0]), labels]
        return jnp.mean(lse - correct)

    return (ce(logits1) + ce(logits2)) / 2.0


if __name__ == "__main__":
    key = jax.random.PRNGKey(0)
    k1, k2 = jax.random.split(key)
    B, D = 16, 32
    features1 = jax.random.normal(k1, (B, D), dtype=jnp.float32)
    features2 = jax.random.normal(k2, (B, D), dtype=jnp.float32)
    # CLIP-style logit scale: exp of a learned temperature.
    logit_scale = jnp.exp(jnp.float32(jnp.log(1.0 / 0.07)))

    # block_rows=8 -> a 2x2 grid so the tiled online-LSE path is exercised.
    loss = infonce_loss(features1, features2, logit_scale, block_rows=8)
    jax.block_until_ready(loss)

    ref = _reference_loss(features1, features2, logit_scale)

    # Default path uses bf16 MXU operands (f32 accumulation): loose tolerance.
    assert jnp.allclose(loss, ref, rtol=5e-2, atol=1e-1), (loss, ref)

    # Full-f32 compute path: tight tolerance against the reference.
    loss_f32 = infonce_loss(features1, features2, logit_scale,
                            compute_dtype=jnp.float32, block_rows=8)
    jax.block_until_ready(loss_f32)
    assert jnp.allclose(loss_f32, ref, rtol=1e-5, atol=5e-5), (loss_f32, ref)

    print("KERNEL_OK")
</pallas_src>

<mosaic_0001>
module attributes {stable_mosaic.version = 11 : i64} {
  func.func @_infonce_kernel(%arg0: i32, %arg1: i32, %arg2: memref<1x1xf32, #tpu.memory_space<smem>>, %arg3: memref<8x32xf32, #tpu.memory_space<vmem>>, %arg4: memref<8x32xf32, #tpu.memory_space<vmem>>, %arg5: memref<8x32xf32, #tpu.memory_space<vmem>>, %arg6: memref<8x32xf32, #tpu.memory_space<vmem>>, %arg7: memref<8x128xf32, #tpu.memory_space<vmem>>, %arg8: memref<8x1xf32, #tpu.memory_space<vmem>>, %arg9: memref<8x1xf32, #tpu.memory_space<vmem>>, %arg10: memref<8x1xf32, #tpu.memory_space<vmem>>, %arg11: memref<8x1xf32, #tpu.memory_space<vmem>>) attributes {dimension_semantics = [#tpu.dimension_semantics<parallel>, #tpu.dimension_semantics<arbitrary>], iteration_bounds = array<i64: 2, 2>, scalar_prefetch = 0 : i64, scratch_operands = 4 : i64, tpu.core_type = #tpu.core_type<tc>, window_params = [{transform_indices = @transform_0, window_bounds = array<i64: 1, 1>}, {transform_indices = @transform_1, window_bounds = array<i64: 8, 32>}, {transform_indices = @transform_2, window_bounds = array<i64: 8, 32>}, {transform_indices = @transform_3, window_bounds = array<i64: 8, 32>}, {transform_indices = @transform_4, window_bounds = array<i64: 8, 32>}, {transform_indices = @transform_5, window_bounds = array<i64: 8, 128>}]} {
    %c0_i32 = arith.constant 0 : i32
    %0 = arith.cmpi eq, %arg1, %c0_i32 : i32
    %1 = arith.extui %0 : i1 to i32
    %c0_i32_0 = arith.constant 0 : i32
    %2 = arith.cmpi ne, %1, %c0_i32_0 : i32
    scf.if %2 {
      %cst_40 = arith.constant 0xFF800000 : f32
      %85 = vector.broadcast %cst_40 : f32 to vector<8x1xf32>
      %cst_41 = arith.constant 0.000000e+00 : f32
      %86 = vector.broadcast %cst_41 : f32 to vector<8x1xf32>
      %c0_42 = arith.constant 0 : index
      %c0_43 = arith.constant 0 : index
      %87 = vector.load %arg8[%c0_42, %c0_43] : memref<8x1xf32, #tpu.memory_space<vmem>>, vector<8x1xf32>
      tpu.vector_store %arg8[%c0_42, %c0_43], %85 {strides = array<i32>} : memref<8x1xf32, #tpu.memory_space<vmem>>, vector<8x1xf32>,
      %c0_44 = arith.constant 0 : index
      %c0_45 = arith.constant 0 : index
      %88 = vector.load %arg10[%c0_44, %c0_45] : memref<8x1xf32, #tpu.memory_space<vmem>>, vector<8x1xf32>
      tpu.vector_store %arg10[%c0_44, %c0_45], %85 {strides = array<i32>} : memref<8x1xf32, #tpu.memory_space<vmem>>, vector<8x1xf32>,
      %c0_46 = arith.constant 0 : index
      %c0_47 = arith.constant 0 : index
      %89 = vector.load %arg9[%c0_46, %c0_47] : memref<8x1xf32, #tpu.memory_space<vmem>>, vector<8x1xf32>
      tpu.vector_store %arg9[%c0_46, %c0_47], %86 {strides = array<i32>} : memref<8x1xf32, #tpu.memory_space<vmem>>, vector<8x1xf32>,
      %c0_48 = arith.constant 0 : index
      %c0_49 = arith.constant 0 : index
      %90 = vector.load %arg11[%c0_48, %c0_49] : memref<8x1xf32, #tpu.memory_space<vmem>>, vector<8x1xf32>
      tpu.vector_store %arg11[%c0_48, %c0_49], %86 {strides = array<i32>} : memref<8x1xf32, #tpu.memory_space<vmem>>, vector<8x1xf32>,
    } else {
    }
    %c0 = arith.constant 0 : index
    %c0_1 = arith.constant 0 : index
    %3 = memref.load %arg2[%c0, %c0_1] : memref<1x1xf32, #tpu.memory_space<smem>>
    %c0_2 = arith.constant 0 : index
    %c0_3 = arith.constant 0 : index
    %4 = vector.load %arg3[%c0_2, %c0_3] : memref<8x32xf32, #tpu.memory_space<vmem>>, vector<8x32xf32>
    %5 = arith.mulf %4, %4 : vector<8x32xf32>
    %cst = arith.constant dense<0.000000e+00> : vector<8xf32>
    %6 = vector.multi_reduction <add>, %5, %cst [1] : vector<8x32xf32> to vector<8xf32>
    %7 = vector.shape_cast %6 : vector<8xf32> to vector<8x1xf32>
    %cst_4 = arith.constant 1.000000e-24 : f32
    %8 = vector.broadcast %cst_4 : f32 to vector<8x1xf32>
    %9 = arith.maximumf %7, %8 : vector<8x1xf32>
    %10 = math.rsqrt %9 : vector<8x1xf32>
    %11 = vector.broadcast %3 : f32 to vector<8x1xf32>
    %12 = arith.mulf %10, %11 : vector<8x1xf32>
    %13 = vector.broadcast %12 : vector<8x1xf32> to vector<8x32xf32>
    %14 = arith.mulf %4, %13 : vector<8x32xf32>
    %c0_5 = arith.constant 0 : index
    %c0_6 = arith.constant 0 : index
    %15 = vector.load %arg4[%c0_5, %c0_6] : memref<8x32xf32, #tpu.memory_space<vmem>>, vector<8x32xf32>
    %16 = arith.mulf %15, %15 : vector<8x32xf32>
    %cst_7 = arith.constant dense<0.000000e+00> : vector<8xf32>
    %17 = vector.multi_reduction <add>, %16, %cst_7 [1] : vector<8x32xf32> to vector<8xf32>
    %18 = vector.shape_cast %17 : vector<8xf32> to vector<8x1xf32>
    %cst_8 = arith.constant 1.000000e-24 : f32
    %19 = vector.broadcast %cst_8 : f32 to vector<8x1xf32>
    %20 = arith.maximumf %18, %19 : vector<8x1xf32>
    %21 = math.rsqrt %20 : vector<8x1xf32>
    %22 = vector.broadcast %21 : vector<8x1xf32> to vector<8x32xf32>
    %23 = arith.mulf %15, %22 : vector<8x32xf32>
    %c0_9 = arith.constant 0 : index
    %c0_10 = arith.constant 0 : index
    %24 = vector.load %arg5[%c0_9, %c0_10] : memref<8x32xf32, #tpu.memory_space<vmem>>, vector<8x32xf32>
    %25 = arith.mulf %24, %24 : vector<8x32xf32>
    %cst_11 = arith.constant dense<0.000000e+00> : vector<8xf32>
    %26 = vector.multi_reduction <add>, %25, %cst_11 [1] : vector<8x32xf32> to vector<8xf32>
    %27 = vector.shape_cast %26 : vector<8xf32> to vector<8x1xf32>
    %cst_12 = arith.constant 1.000000e-24 : f32
    %28 = vector.broadcast %cst_12 : f32 to vector<8x1xf32>
    %29 = arith.maximumf %27, %28 : vector<8x1xf32>
    %30 = math.rsqrt %29 : vector<8x1xf32>
    %31 = vector.broadcast %30 : vector<8x1xf32> to vector<8x32xf32>
    %32 = arith.mulf %24, %31 : vector<8x32xf32>
    %c0_13 = arith.constant 0 : index
    %c0_14 = arith.constant 0 : index
    %33 = vector.load %arg6[%c0_13, %c0_14] : memref<8x32xf32, #tpu.memory_space<vmem>>, vector<8x32xf32>
    %34 = arith.mulf %33, %33 : vector<8x32xf32>
    %cst_15 = arith.constant dense<0.000000e+00> : vector<8xf32>
    %35 = vector.multi_reduction <add>, %34, %cst_15 [1] : vector<8x32xf32> to vector<8xf32>
    %36 = vector.shape_cast %35 : vector<8xf32> to vector<8x1xf32>
    %cst_16 = arith.constant 1.000000e-24 : f32
    %37 = vector.broadcast %cst_16 : f32 to vector<8x1xf32>
    %38 = arith.maximumf %36, %37 : vector<8x1xf32>
    %39 = math.rsqrt %38 : vector<8x1xf32>
    %40 = vector.broadcast %3 : f32 to vector<8x1xf32>
    %41 = arith.mulf %39, %40 : vector<8x1xf32>
    %42 = vector.broadcast %41 : vector<8x1xf32> to vector<8x32xf32>
    %43 = arith.mulf %33, %42 : vector<8x32xf32>
    %44 = arith.truncf %14 : vector<8x32xf32> to vector<8x32xbf16>
    %45 = arith.truncf %23 : vector<8x32xf32> to vector<8x32xbf16>
    %cst_17 = arith.constant dense<0.000000e+00> : vector<8x8xf32>
    %46 = tpu.matmul %44, %45, %cst_17 {dimension_numbers = #tpu.dot_dimension_numbers<[1], [1], [0], [0], [0, 0, 1, 0], [], []>} : vector<8x32xbf16>, vector<8x32xbf16>, vector<8x8xf32> -> vector<8x8xf32>
    %47 = arith.truncf %32 : vector<8x32xf32> to vector<8x32xbf16>
    %48 = arith.truncf %43 : vector<8x32xf32> to vector<8x32xbf16>
    %cst_18 = arith.constant dense<0.000000e+00> : vector<8x8xf32>
    %49 = tpu.matmul %47, %48, %cst_18 {dimension_numbers = #tpu.dot_dimension_numbers<[1], [1], [0], [0], [0, 0, 1, 0], [], []>} : vector<8x32xbf16>, vector<8x32xbf16>, vector<8x8xf32> -> vector<8x8xf32>
    %c0_19 = arith.constant 0 : index
    %c0_20 = arith.constant 0 : index
    %50 = vector.load %arg8[%c0_19, %c0_20] : memref<8x1xf32, #tpu.memory_space<vmem>>, vector<8x1xf32>
    %cst_21 = arith.constant dense<0xFF800000> : vector<8xf32>
    %51 = vector.multi_reduction <maximumf>, %46, %cst_21 [1] : vector<8x8xf32> to vector<8xf32>
    %52 = vector.shape_cast %51 : vector<8xf32> to vector<8x1xf32>
    %53 = arith.maximumf %50, %52 : vector<8x1xf32>
    %c0_22 = arith.constant 0 : index
    %c0_23 = arith.constant 0 : index
    %54 = vector.load %arg9[%c0_22, %c0_23] : memref<8x1xf32, #tpu.memory_space<vmem>>, vector<8x1xf32>
    %55 = arith.subf %50, %53 : vector<8x1xf32>
    %56 = math.exp %55 : vector<8x1xf32>
    %57 = arith.mulf %54, %56 : vector<8x1xf32>
    %58 = vector.broadcast %53 : vector<8x1xf32> to vector<8x8xf32>
    %59 = arith.subf %46, %58 : vector<8x8xf32>
    %60 = math.exp %59 : vector<8x8xf32>
    %cst_24 = arith.constant dense<0.000000e+00> : vector<8xf32>
    %61 = vector.multi_reduction <add>, %60, %cst_24 [1] : vector<8x8xf32> to vector<8xf32>
    %62 = vector.shape_cast %61 : vector<8xf32> to vector<8x1xf32>
    %63 = arith.addf %57, %62 : vector<8x1xf32>
    %c0_25 = arith.constant 0 : index
    %c0_26 = arith.constant 0 : index
    %64 = vector.load %arg9[%c0_25, %c0_26] : memref<8x1xf32, #tpu.memory_space<vmem>>, vector<8x1xf32>
    tpu.vector_store %arg9[%c0_25, %c0_26], %63 {strides = array<i32>} : memref<8x1xf32, #tpu.memory_space<vmem>>, vector<8x1xf32>,
    %c0_27 = arith.constant 0 : index
    %c0_28 = arith.constant 0 : index
    %65 = vector.load %arg8[%c0_27, %c0_28] : memref<8x1xf32, #tpu.memory_space<vmem>>, vector<8x1xf32>
    tpu.vector_store %arg8[%c0_27, %c0_28], %53 {strides = array<i32>} : memref<8x1xf32, #tpu.memory_space<vmem>>, vector<8x1xf32>,
    %c0_29 = arith.constant 0 : index
    %c0_30 = arith.constant 0 : index
    %66 = vector.load %arg10[%c0_29, %c0_30] : memref<8x1xf32, #tpu.memory_space<vmem>>, vector<8x1xf32>
    %cst_31 = arith.constant dense<0xFF800000> : vector<8xf32>
    %67 = vector.multi_reduction <maximumf>, %49, %cst_31 [1] : vector<8x8xf32> to vector<8xf32>
    %68 = vector.shape_cast %67 : vector<8xf32> to vector<8x1xf32>
    %69 = arith.maximumf %66, %68 : vector<8x1xf32>
    %c0_32 = arith.constant 0 : index
    %c0_33 = arith.constant 0 : index
    %70 = vector.load %arg11[%c0_32, %c0_33] : memref<8x1xf32, #tpu.memory_space<vmem>>, vector<8x1xf32>
    %71 = arith.subf %66, %69 : vector<8x1xf32>
    %72 = math.exp %71 : vector<8x1xf32>
    %73 = arith.mulf %70, %72 : vector<8x1xf32>
    %74 = vector.broadcast %69 : vector<8x1xf32> to vector<8x8xf32>
    %75 = arith.subf %49, %74 : vector<8x8xf32>
    %76 = math.exp %75 : vector<8x8xf32>
    %cst_34 = arith.constant dense<0.000000e+00> : vector<8xf32>
    %77 = vector.multi_reduction <add>, %76, %cst_34 [1] : vector<8x8xf32> to vector<8xf32>
    %78 = vector.shape_cast %77 : vector<8xf32> to vector<8x1xf32>
    %79 = arith.addf %73, %78 : vector<8x1xf32>
    %c0_35 = arith.constant 0 : index
    %c0_36 = arith.constant 0 : index
    %80 = vector.load %arg11[%c0_35, %c0_36] : memref<8x1xf32, #tpu.memory_space<vmem>>, vector<8x1xf32>
    tpu.vector_store %arg11[%c0_35, %c0_36], %79 {strides = array<i32>} : memref<8x1xf32, #tpu.memory_space<vmem>>, vector<8x1xf32>,
    %c0_37 = arith.constant 0 : index
    %c0_38 = arith.constant 0 : index
    %81 = vector.load %arg10[%c0_37, %c0_38] : memref<8x1xf32, #tpu.memory_space<vmem>>, vector<8x1xf32>
    tpu.vector_store %arg10[%c0_37, %c0_38], %69 {strides = array<i32>} : memref<8x1xf32, #tpu.memory_space<vmem>>, vector<8x1xf32>,
    %c1_i32 = arith.constant 1 : i32
    %82 = arith.cmpi eq, %arg1, %c1_i32 : i32
    %83 = arith.extui %82 : i1 to i32
    %c0_i32_39 = arith.constant 0 : i32
    %84 = arith.cmpi ne, %83, %c0_i32_39 : i32
    scf.if %84 {
      %c0_40 = arith.constant 0 : index
      %c0_41 = arith.constant 0 : index
      %85 = vector.load %arg8[%c0_40, %c0_41] : memref<8x1xf32, #tpu.memory_space<vmem>>, vector<8x1xf32>
      %c0_42 = arith.constant 0 : index
      %c0_43 = arith.constant 0 : index
      %86 = vector.load %arg9[%c0_42, %c0_43] : memref<8x1xf32, #tpu.memory_space<vmem>>, vector<8x1xf32>
      %87 = math.log %86 : vector<8x1xf32>
      %88 = arith.addf %85, %87 : vector<8x1xf32>
      %c0_44 = arith.constant 0 : index
      %c0_45 = arith.constant 0 : index
      %89 = vector.load %arg10[%c0_44, %c0_45] : memref<8x1xf32, #tpu.memory_space<vmem>>, vector<8x1xf32>
      %c0_46 = arith.constant 0 : index
      %c0_47 = arith.constant 0 : index
      %90 = vector.load %arg11[%c0_46, %c0_47] : memref<8x1xf32, #tpu.memory_space<vmem>>, vector<8x1xf32>
      %91 = math.log %90 : vector<8x1xf32>
      %92 = arith.addf %89, %91 : vector<8x1xf32>
      %93 = arith.mulf %14, %32 : vector<8x32xf32>
      %cst_48 = arith.constant dense<0.000000e+00> : vector<8xf32>
      %94 = vector.multi_reduction <add>, %93, %cst_48 [1] : vector<8x32xf32> to vector<8xf32>
      %95 = vector.shape_cast %94 : vector<8xf32> to vector<8x1xf32>
      %96 = arith.subf %88, %95 : vector<8x1xf32>
      %97 = arith.subf %92, %95 : vector<8x1xf32>
      %98 = arith.addf %96, %97 : vector<8x1xf32>
      %99 = vector.shape_cast %98 : vector<8x1xf32> to vector<8x1xf32>
      %100 = vector.broadcast %99 : vector<8x1xf32> to vector<8x128xf32>
      %c0_49 = arith.constant 0 : index
      %c0_50 = arith.constant 0 : index
      %101 = vector.load %arg7[%c0_49, %c0_50] : memref<8x128xf32, #tpu.memory_space<vmem>>, vector<8x128xf32>
      tpu.vector_store %arg7[%c0_49, %c0_50], %100 {strides = array<i32>} : memref<8x128xf32, #tpu.memory_space<vmem>>, vector<8x128xf32>,
    } else {
    }
    return
  }
  func.func @transform_0(%arg0: i32, %arg1: i32) -> (i32, i32) {
    %c0_i32 = arith.constant 0 : i32
    %c0_i32_0 = arith.constant 0 : i32
    %c0_i32_1 = arith.constant 0 : i32
    return %c0_i32, %c0_i32_0 : i32, i32
  }
  func.func @transform_1(%arg0: i32, %arg1: i32) -> (i32, i32) {
    %c0_i32 = arith.constant 0 : i32
    %c0_i32_0 = arith.constant 0 : i32
    return %arg0, %c0_i32 : i32, i32
  }
  func.func @transform_2(%arg0: i32, %arg1: i32) -> (i32, i32) {
    %c0_i32 = arith.constant 0 : i32
    %c0_i32_0 = arith.constant 0 : i32
    return %arg1, %c0_i32 : i32, i32
  }
  func.func @transform_3(%arg0: i32, %arg1: i32) -> (i32, i32) {
    %c0_i32 = arith.constant 0 : i32
    %c0_i32_0 = arith.constant 0 : i32
    return %arg0, %c0_i32 : i32, i32
  }
  func.func @transform_4(%arg0: i32, %arg1: i32) -> (i32, i32) {
    %c0_i32 = arith.constant 0 : i32
    %c0_i32_0 = arith.constant 0 : i32
    return %arg1, %c0_i32 : i32, i32
  }
  func.func @transform_5(%arg0: i32, %arg1: i32) -> (i32, i32) {
    %c0_i32 = arith.constant 0 : i32
    %c0_i32_0 = arith.constant 0 : i32
    return %arg0, %c0_i32 : i32, i32
  }
}

</mosaic_0001>

<llo_original>
// kernel: tpu_custom_call.1
$region0: #{tpu_custom_call.1}
  #allocation0 [shape = 'u32[]', space=smem, size = 0x4, offset = 0x4, fixed_abs, tag = 'smem constant byte address 0x4 - core index']
  #allocation1 [shape = 'u32[72,128]{1,0:T(1,128)}', space=vmem, size = 0x9000, scoped, tag = 'internal scratch']
  #allocation2 [shape = 'f32[8,1]{1,0:T(8,128)}', space=vmem, size = 0x1000, scoped, tag = 'scratch operand']
  #allocation3 [shape = 'f32[8,1]{1,0:T(8,128)}', space=vmem, size = 0x1000, scoped, tag = 'scratch operand']
  #allocation4 [shape = 'f32[8,1]{1,0:T(8,128)}', space=vmem, size = 0x1000, scoped, tag = 'scratch operand']
  #allocation5 [shape = 'f32[8,1]{1,0:T(8,128)}', space=vmem, size = 0x1000, scoped, tag = 'scratch operand']
  #allocation6 [shape = 'f32[1,1]{1,0:T(1,128)S(6)}', space=smem, size = 0x200, scoped, tag = 'scoped memory for tpu_custom_call.1']
  %s0 = inlined_call_operand.<no memory space> [shape: f32[1,1], index: 0, kind: input, shape index: {}]
  %s1 = inlined_call_operand.hbm [shape: f32[16,32], index: 1, kind: input, shape index: {}]
  %s2 = inlined_call_operand.hbm [shape: f32[16,32], index: 2, kind: input, shape index: {}]
  %s3 = inlined_call_operand.hbm [shape: f32[16,32], index: 3, kind: input, shape index: {}]
  %s4 = inlined_call_operand.hbm [shape: f32[16,32], index: 4, kind: input, shape index: {}]
  %s5 = inlined_call_operand.hbm [shape: f32[16,128], index: 5, kind: output, shape index: {}]
  %s6 = sld [smem:[#allocation0]]
  $region77: #{tpu_custom_call.1} parent=0
    _
  %s8 = ssub.s32 1, %s6
  %s9 = scalar_select 0, %s8, %s6
  %10 = sst [smem:[#allocation6]] %s0
  $region1: #{tpu_custom_call.1} parent=0
    #allocation7 [shape = 'u8[8192]{0}', space=vmem, size = 0x2000, scoped, tag = 'input window, operand 1']
    #allocation8 [shape = 's32[2]{0}', space=sflag, size = 0x8, scoped, tag = 'scoped memory for tpu_custom_call.1']
    #allocation9 [shape = 's32[2]{0}', space=sflag, size = 0x8, scoped, tag = 'scoped memory for tpu_custom_call.1']
    #allocation10 [shape = 'u8[8192]{0}', space=vmem, size = 0x2000, scoped, tag = 'input window, operand 2']
    #allocation11 [shape = 's32[2]{0}', space=sflag, size = 0x8, scoped, tag = 'scoped memory for tpu_custom_call.1']
    #allocation12 [shape = 'u8[8192]{0}', space=vmem, size = 0x2000, scoped, tag = 'input window, operand 3']
    #allocation13 [shape = 'u8[8192]{0}', space=vmem, size = 0x2000, scoped, tag = 'input window, operand 4']
    #allocation14 [shape = 's32[2]{0}', space=sflag, size = 0x8, scoped, tag = 'scoped memory for tpu_custom_call.1']
    #allocation15 [shape = 'u8[8192]{0}', space=vmem, size = 0x2000, scoped, tag = 'output window, operand 0']
    %11 = vsyncpa [#allocation8], 0
    %s12 = scalar_lea.sflag [#allocation8], 1
    %13 = vsyncpa %s12, 0
    %14 = vsyncpa [#allocation11], 0
    %s15 = scalar_lea.sflag [#allocation11], 1
    %16 = vsyncpa %s15, 0
    %17 = vsyncpa [#allocation14], 0
    %s18 = scalar_lea.sflag [#allocation14], 1
    %19 = vsyncpa %s18, 0
    %20 = vsyncpa [#allocation9], 0
    %s21 = scalar_lea.sflag [#allocation9], 1
    %22 = vsyncpa %s21, 0
    loop: start=0, step=1, limit=6
    $region2: #{tpu_custom_call.1} parent=1 // loop_pre_header
      _
    $region3: #{tpu_custom_call.1} parent=1 // loop_header
      %s24 = sphi 0, %s28
      %p25 = scmp.ge.s32.totalorder %s24, 6
      %s31 = sphi 0, %s43
      %s32 = sphi 0, %s39
      %s33 = sphi 0, %s31
      %s34 = sphi 0, %s32
      %s35 = sphi 0, %s33
      %s36 = sphi 0, %s34
      %s44 = sphi 0, %s44
      %s46 = sphi 0, %s44
      %s47 = sphi 0, %s46
      %s61 = sphi 0, %s47
      %s67 = sphi 0, %s69
      %s70 = sphi 0, %s67
      %s71 = sphi 0, %s70
      %s87 = sphi 0, %s71
      %s93 = sphi 0, %s95
      %s96 = sphi 0, %s93
      %s97 = sphi 0, %s96
      %s113 = sphi 0, %s97
      %s119 = sphi 0, %s121
      %s122 = sphi 0, %s119
      %s123 = sphi 0, %s122
      %s139 = sphi 0, %s123
      %s145 = sphi 0, %s147
      %s148 = sphi 0, %s145
      %s149 = sphi 0, %s148
      %s165 = sphi 0, %s149
      %s171 = sphi 0, %s173
      %s174 = sphi 0, %s171
      %s175 = sphi 0, %s174
      %s191 = sphi 0, %s175
    $region4: #{tpu_custom_call.1} parent=1 // loop_header_branch
      %27 = sbr.rel (%p25) target = $region8
    $region5: #{tpu_custom_call.1} parent=1 // loop_body
      %s29 = ssub.s32 %s24, 1
      %s30 = ssub.s32 %s24, 2
      %s37 = sadd.s32 1, %s32
      %p38 = scmp.ge.s32.totalorder %s37, 2
      %s39 = scalar_select %p38, 0, %s37
      %s40 = sadd.s32 1, %s31
      %s41 = scalar_select %p38, %s40, %s31
      %p42 = scmp.ge.s32.totalorder %s41, 2
      %s43 = scalar_select %p42, 0, %s41
      %s45 = sadd.s32 %s44, 1
      %p48 = scmp.eq.s32.totalorder %s24, 3
      %p49 = scmp.ne.s32.totalorder %s44, %s46
      %p50 = scmp.eq.s32.totalorder %s24, 0
      %p51 = por %p49, %p50
      %p52 = scmp.ne.s32.totalorder %s44, %s46
      %p53 = scmp.eq.s32.totalorder %s29, 3
      %p54 = por %p52, %p53
      %p55 = scmp.ne.s32.totalorder %s46, %s47
      %p56 = scmp.eq.s32.totalorder %s29, 0
      %p57 = por %p55, %p56
      %p58 = scmp.ne.s32.totalorder %s46, %s47
      %p59 = scmp.eq.s32.totalorder %s30, 3
      %p60 = por %p58, %p59
      %p62 = scmp.ne.s32.totalorder %s47, %s61
      %p63 = scmp.eq.s32.totalorder %s30, 0
      %p64 = por %p62, %p63
      %s65 = ssub.s32 %s31, %s43
      %p66 = scmp.eq.s32.totalorder %s65, 0
      %s68 = sadd.s32 %s67, 1
      %s69 = scalar_select %p66, %s67, %s68
      %p72 = pneg %p66
      %p73 = scmp.eq.s32.totalorder %s24, 3
      %p74 = por %p72, %p73
      %p75 = scmp.ne.s32.totalorder %s67, %s70
      %p76 = scmp.eq.s32.totalorder %s24, 0
      %p77 = por %p75, %p76
      %p78 = scmp.ne.s32.totalorder %s67, %s70
      %p79 = scmp.eq.s32.totalorder %s29, 3
      %p80 = por %p78, %p79
      %p81 = scmp.ne.s32.totalorder %s70, %s71
      %p82 = scmp.eq.s32.totalorder %s29, 0
      %p83 = por %p81, %p82
      %p84 = scmp.ne.s32.totalorder %s70, %s71
      %p85 = scmp.eq.s32.totalorder %s30, 3
      %p86 = por %p84, %p85
      %p88 = scmp.ne.s32.totalorder %s71, %s87
      %p89 = scmp.eq.s32.totalorder %s30, 0
      %p90 = por %p88, %p89
      %s91 = ssub.s32 %s32, %s39
      %p92 = scmp.eq.s32.totalorder %s91, 0
      %s94 = sadd.s32 %s93, 1
      %s95 = scalar_select %p92, %s93, %s94
      %p98 = pneg %p92
      %p99 = scmp.eq.s32.totalorder %s24, 3
      %p100 = por %p98, %p99
      %p101 = scmp.ne.s32.totalorder %s93, %s96
      %p102 = scmp.eq.s32.totalorder %s24, 0
      %p103 = por %p101, %p102
      %p104 = scmp.ne.s32.totalorder %s93, %s96
      %p105 = scmp.eq.s32.totalorder %s29, 3
      %p106 = por %p104, %p105
      %p107 = scmp.ne.s32.totalorder %s96, %s97
      %p108 = scmp.eq.s32.totalorder %s29, 0
      %p109 = por %p107, %p108
      %p110 = scmp.ne.s32.totalorder %s96, %s97
      %p111 = scmp.eq.s32.totalorder %s30, 3
      %p112 = por %p110, %p111
      %p114 = scmp.ne.s32.totalorder %s97, %s113
      %p115 = scmp.eq.s32.totalorder %s30, 0
      %p116 = por %p114, %p115
      %s117 = ssub.s32 %s31, %s43
      %p118 = scmp.eq.s32.totalorder %s117, 0
      %s120 = sadd.s32 %s119, 1
      %s121 = scalar_select %p118, %s119, %s120
      %p124 = pneg %p118
      %p125 = scmp.eq.s32.totalorder %s24, 3
      %p126 = por %p124, %p125
      %p127 = scmp.ne.s32.totalorder %s119, %s122
      %p128 = scmp.eq.s32.totalorder %s24, 0
      %p129 = por %p127, %p128
      %p130 = scmp.ne.s32.totalorder %s119, %s122
      %p131 = scmp.eq.s32.totalorder %s29, 3
      %p132 = por %p130, %p131
      %p133 = scmp.ne.s32.totalorder %s122, %s123
      %p134 = scmp.eq.s32.totalorder %s29, 0
      %p135 = por %p133, %p134
      %p136 = scmp.ne.s32.totalorder %s122, %s123
      %p137 = scmp.eq.s32.totalorder %s30, 3
      %p138 = por %p136, %p137
      %p140 = scmp.ne.s32.totalorder %s123, %s139
      %p141 = scmp.eq.s32.totalorder %s30, 0
      %p142 = por %p140, %p141
      %s143 = ssub.s32 %s32, %s39
      %p144 = scmp.eq.s32.totalorder %s143, 0
      %s146 = sadd.s32 %s145, 1
      %s147 = scalar_select %p144, %s145, %s146
      %p150 = pneg %p144
      %p151 = scmp.eq.s32.totalorder %s24, 3
      %p152 = por %p150, %p151
      %p153 = scmp.ne.s32.totalorder %s145, %s148
      %p154 = scmp.eq.s32.totalorder %s24, 0
      %p155 = por %p153, %p154
      %p156 = scmp.ne.s32.totalorder %s145, %s148
      %p157 = scmp.eq.s32.totalorder %s29, 3
      %p158 = por %p156, %p157
      %p159 = scmp.ne.s32.totalorder %s148, %s149
      %p160 = scmp.eq.s32.totalorder %s29, 0
      %p161 = por %p159, %p160
      %p162 = scmp.ne.s32.totalorder %s148, %s149
      %p163 = scmp.eq.s32.totalorder %s30, 3
      %p164 = por %p162, %p163
      %p166 = scmp.ne.s32.totalorder %s149, %s165
      %p167 = scmp.eq.s32.totalorder %s30, 0
      %p168 = por %p166, %p167
      %s169 = ssub.s32 %s31, %s43
      %p170 = scmp.eq.s32.totalorder %s169, 0
      %s172 = sadd.s32 %s171, 1
      %s173 = scalar_select %p170, %s171, %s172
      %p176 = pneg %p170
      %p177 = scmp.eq.s32.totalorder %s24, 3
      %p178 = por %p176, %p177
      %p179 = scmp.ne.s32.totalorder %s171, %s174
      %p180 = scmp.eq.s32.totalorder %s24, 0
      %p181 = por %p179, %p180
      %p182 = scmp.ne.s32.totalorder %s171, %s174
      %p183 = scmp.eq.s32.totalorder %s29, 3
      %p184 = por %p182, %p183
      %p185 = scmp.ne.s32.totalorder %s174, %s175
      %p186 = scmp.eq.s32.totalorder %s29, 0
      %p187 = por %p185, %p186
      %p188 = scmp.ne.s32.totalorder %s174, %s175
      %p189 = scmp.eq.s32.totalorder %s30, 3
      %p190 = por %p188, %p189
      %p192 = scmp.ne.s32.totalorder %s175, %s191
      %p193 = scmp.eq.s32.totalorder %s30, 0
      %p194 = por %p192, %p193
      %p195 = scmp.le.s32.totalorder 1, %s24
      %p196 = scmp.lt.s32.totalorder %s24, 5
      %p197 = pnand %p195, %p196
      %p198 = pneg %p197
      // Predicated region
      $region9: #{tpu_custom_call.1} parent=5 // pred_check
        _
      $region10: #{tpu_custom_call.1} parent=5 // pred_check_branch
        %200 = sbr.rel (%p197) target = $region12
      $region11: #{tpu_custom_call.1} parent=5 // pred_region
        %s201 = ssub.s32 %s24, 1
        // Predicated region
        $region13: #{tpu_custom_call.1} parent=11 // pred_check
          %p202 = pneg %p57
        $region14: #{tpu_custom_call.1} parent=11 // pred_check_branch
          %204 = sbr.rel (%p202) target = $region16
        $region15: #{tpu_custom_call.1} parent=11 // pred_region
          _
        $region16: #{tpu_custom_call.1} parent=11 // pred_fallthru
          _
      $region12: #{tpu_custom_call.1} parent=5 // pred_fallthru
        _
      %p205 = scmp.lt.s32.totalorder %s24, 4
      // Predicated region
      $region17: #{tpu_custom_call.1} parent=5 // pred_check
        %p206 = pneg %p205
      $region18: #{tpu_custom_call.1} parent=5 // pred_check_branch
        %208 = sbr.rel (%p206) target = $region20
      $region19: #{tpu_custom_call.1} parent=5 // pred_region
        // Predicated region
        $region21: #{tpu_custom_call.1} parent=19 // pred_check
          %p209 = pneg %p77
        $region22: #{tpu_custom_call.1} parent=19 // pred_check_branch
          %211 = sbr.rel (%p209) target = $region24
        $region23: #{tpu_custom_call.1} parent=19 // pred_region
          %s212 = sand.u32 %s67, 1
          %s213 = scalar_lea.sflag [#allocation8], %s212
          %s214 = sand.u32 %s67, 1
          %s215 = smul.addr %s214, 8
          %s216 = scalar_lea.vmem [#allocation7], %s215
          %218 = vsyncadd %s213, 0
          %s219 = smul.addr %s31, 8
          %s220 = scalar_lea.hbm %s1, %s219
          %s222 = sshll.u32 %s220, 4
          %s223 = int_to_ptr.hbm [resolvable:$true] %s222
          %s224 = sshll.u32 %s216, 4
          %s225 = int_to_ptr.vmem [resolvable:$true] %s224
          %227 = dma.hbm_to_vmem [thread:$0]  %s223, 128, %s225, %s213
        $region24: #{tpu_custom_call.1} parent=19 // pred_fallthru
          _
        // Predicated region
        $region25: #{tpu_custom_call.1} parent=19 // pred_check
          %p228 = pneg %p103
        $region26: #{tpu_custom_call.1} parent=19 // pred_check_branch
          %230 = sbr.rel (%p228) target = $region28
        $region27: #{tpu_custom_call.1} parent=19 // pred_region
          %s231 = sand.u32 %s24, 1
          %s232 = scalar_lea.sflag [#allocation11], %s231
          %s233 = sand.u32 %s93, 1
          %s234 = smul.addr %s233, 8
          %s235 = scalar_lea.vmem [#allocation10], %s234
          %237 = vsyncadd %s232, 0
          %s238 = smul.addr %s32, 8
          %s239 = scalar_lea.hbm %s2, %s238
          %s241 = sshll.u32 %s239, 4
          %s242 = int_to_ptr.hbm [resolvable:$true] %s241
          %s243 = sshll.u32 %s235, 4
          %s244 = int_to_ptr.vmem [resolvable:$true] %s243
          %246 = dma.hbm_to_vmem [thread:$0]  %s242, 128, %s244, %s232
        $region28: #{tpu_custom_call.1} parent=19 // pred_fallthru
          _
        // Predicated region
        $region29: #{tpu_custom_call.1} parent=19 // pred_check
          %p247 = pneg %p129
        $region30: #{tpu_custom_call.1} parent=19 // pred_check_branch
          %249 = sbr.rel (%p247) target = $region32
        $region31: #{tpu_custom_call.1} parent=19 // pred_region
          %s250 = sand.u32 %s24, 1
          %s251 = scalar_lea.sflag [#allocation11], %s250
          %s252 = sand.u32 %s119, 1
          %s253 = smul.addr %s252, 8
          %s254 = scalar_lea.vmem [#allocation12], %s253
          %256 = vsyncadd %s251, 0
          %s257 = smul.addr %s31, 8
          %s258 = scalar_lea.hbm %s3, %s257
          %s260 = sshll.u32 %s258, 4
          %s261 = int_to_ptr.hbm [resolvable:$true] %s260
          %s262 = sshll.u32 %s254, 4
          %s263 = int_to_ptr.vmem [resolvable:$true] %s262
          %265 = dma.hbm_to_vmem [thread:$0]  %s261, 128, %s263, %s251
        $region32: #{tpu_custom_call.1} parent=19 // pred_fallthru
          _
        // Predicated region
        $region33: #{tpu_custom_call.1} parent=19 // pred_check
          %p266 = pneg %p155
        $region34: #{tpu_custom_call.1} parent=19 // pred_check_branch
          %268 = sbr.rel (%p266) target = $region36
        $region35: #{tpu_custom_call.1} parent=19 // pred_region
          %s269 = sand.u32 %s145, 1
          %s270 = scalar_lea.sflag [#allocation14], %s269
          %s271 = sand.u32 %s145, 1
          %s272 = smul.addr %s271, 8
          %s273 = scalar_lea.vmem [#allocation13], %s272
          %275 = vsyncadd %s270, 0
          %s276 = smul.addr %s32, 8
          %s277 = scalar_lea.hbm %s4, %s276
          %s279 = sshll.u32 %s277, 4
          %s280 = int_to_ptr.hbm [resolvable:$true] %s279
          %s281 = sshll.u32 %s273, 4
          %s282 = int_to_ptr.vmem [resolvable:$true] %s281
          %284 = dma.hbm_to_vmem [thread:$0]  %s280, 128, %s282, %s270
        $region36: #{tpu_custom_call.1} parent=19 // pred_fallthru
          _
      $region20: #{tpu_custom_call.1} parent=5 // pred_fallthru
        _
      %p285 = scmp.le.s32.totalorder 1, %s24
      %p286 = scmp.lt.s32.totalorder %s24, 5
      %p287 = pnand %p285, %p286
      %p288 = pneg %p287
      // Predicated region
      $region37: #{tpu_custom_call.1} parent=5 // pred_check
        _
      $region38: #{tpu_custom_call.1} parent=5 // pred_check_branch
        %290 = sbr.rel (%p287) target = $region40
      $region39: #{tpu_custom_call.1} parent=5 // pred_region
        %s291 = ssub.s32 %s24, 1
        %s292 = sand.u32 %s70, 1
        %s293 = scalar_lea.sflag [#allocation8], %s292
        %s294 = sand.u32 %s70, 1
        %s295 = smul.addr %s294, 8
        %s296 = scalar_lea.vmem [#allocation7], %s295
        // Predicated region
        $region41: #{tpu_custom_call.1} parent=39 // pred_check
          %p297 = pneg %p83
        $region42: #{tpu_custom_call.1} parent=39 // pred_check_branch
          %299 = sbr.rel (%p297) target = $region44
        $region43: #{tpu_custom_call.1} parent=39 // pred_region
          %301 = dma.done %s293, 128
        $region44: #{tpu_custom_call.1} parent=39 // pred_fallthru
          _
        %s302 = sand.u32 %s29, 1
        %s303 = scalar_lea.sflag [#allocation11], %s302
        %s304 = sand.u32 %s96, 1
        %s305 = smul.addr %s304, 8
        %s306 = scalar_lea.vmem [#allocation10], %s305
        // Predicated region
        $region45: #{tpu_custom_call.1} parent=39 // pred_check
          %p307 = pneg %p109
        $region46: #{tpu_custom_call.1} parent=39 // pred_check_branch
          %309 = sbr.rel (%p307) target = $region48
        $region47: #{tpu_custom_call.1} parent=39 // pred_region
          %311 = dma.done %s303, 128
        $region48: #{tpu_custom_call.1} parent=39 // pred_fallthru
          _
        %s312 = sand.u32 %s29, 1
        %s313 = scalar_lea.sflag [#allocation11], %s312
        %s314 = sand.u32 %s122, 1
        %s315 = smul.addr %s314, 8
        %s316 = scalar_lea.vmem [#allocation12], %s315
        // Predicated region
        $region49: #{tpu_custom_call.1} parent=39 // pred_check
          %p317 = pneg %p135
        $region50: #{tpu_custom_call.1} parent=39 // pred_check_branch
          %319 = sbr.rel (%p317) target = $region52
        $region51: #{tpu_custom_call.1} parent=39 // pred_region
          %321 = dma.done %s313, 128
        $region52: #{tpu_custom_call.1} parent=39 // pred_fallthru
          _
        %s322 = sand.u32 %s148, 1
        %s323 = scalar_lea.sflag [#allocation14], %s322
        %s324 = sand.u32 %s148, 1
        %s325 = smul.addr %s324, 8
        %s326 = scalar_lea.vmem [#allocation13], %s325
        // Predicated region
        $region53: #{tpu_custom_call.1} parent=39 // pred_check
          %p327 = pneg %p161
        $region54: #{tpu_custom_call.1} parent=39 // pred_check_branch
          %329 = sbr.rel (%p327) target = $region56
        $region55: #{tpu_custom_call.1} parent=39 // pred_region
          %331 = dma.done %s323, 128
        $region56: #{tpu_custom_call.1} parent=39 // pred_fallthru
          _
        %p332 = pneg %p57
        %p333 = pneg %p54
        %s334 = sand.u32 %s70, 1
        %s335 = scalar_lea.sflag [#allocation8], %s334
        %s336 = sand.u32 %s70, 1
        %s337 = smul.addr %s336, 8
        %s338 = scalar_lea.vmem [#allocation7], %s337
        %p339 = pneg %p83
        %p340 = pneg %p80
        %s341 = sand.u32 %s29, 1
        %s342 = scalar_lea.sflag [#allocation11], %s341
        %s343 = sand.u32 %s96, 1
        %s344 = smul.addr %s343, 8
        %s345 = scalar_lea.vmem [#allocation10], %s344
        %p346 = pneg %p109
        %p347 = pneg %p106
        %s348 = sand.u32 %s29, 1
        %s349 = scalar_lea.sflag [#allocation11], %s348
        %s350 = sand.u32 %s122, 1
        %s351 = smul.addr %s350, 8
        %s352 = scalar_lea.vmem [#allocation12], %s351
        %p353 = pneg %p135
        %p354 = pneg %p132
        %s355 = sand.u32 %s148, 1
        %s356 = scalar_lea.sflag [#allocation14], %s355
        %s357 = sand.u32 %s148, 1
        %s358 = smul.addr %s357, 8
        %s359 = scalar_lea.vmem [#allocation13], %s358
        %p360 = pneg %p161
        %p361 = pneg %p158
        %p362 = pneg %p187
        %p363 = pneg %p184
        %s364 = sand.u32 %s174, 1
        %s365 = scalar_lea.sflag [#allocation9], %s364
        %s366 = sand.u32 %s174, 1
        %s367 = smul.addr %s366, 8
        %s368 = scalar_lea.vmem [#allocation15], %s367
        %p370 = scmp.eq.s32.totalorder %s34, 0
        // Predicated region
        $region57: #{tpu_custom_call.1} parent=39 // pred_check
          %p371 = pneg %p370
        $region58: #{tpu_custom_call.1} parent=39 // pred_check_branch
          %373 = sbr.rel (%p371) target = $region60
        $region59: #{tpu_custom_call.1} parent=39 // pred_region
          %vm374 = vcmask 7168
          %375 = vst.msk [vmem:[#allocation2] sm:$0xff] %vm374, -inf
          %376 = vst.msk [vmem:[#allocation4] sm:$0xff] %vm374, -inf
          %377 = vst.msk [vmem:[#allocation3] sm:$0xff] %vm374, 0.0
          %378 = vst.msk [vmem:[#allocation5] sm:$0xff] %vm374, 0.0
        $region60: #{tpu_custom_call.1} parent=39 // pred_fallthru
          _
        %s379 = sld [smem:[#allocation6]]
        %v380 = vld [vmem:[%s296] sm:$0xff]
        %v381 = vmul.f32 %v380, %v380
        %vm382 = vcmask 261120
        %v383 = vsel %vm382, %v381, 0.0
        %384 = vadd.xlane.f32.xlu0 %v383
        %v385 = vpop.xlane.xlu0 %384
        %v386 = vmax.f32 %v385, 1e-24
        %v387 = vrsqrt.pop %v386
        %v388 = vmul.f32 %v387, %v386
        %v389 = vmul.f32 %v388, %v387
        %v390 = vmul.f32 0.5, %v389
        %v391 = vsub.f32 1.5, %v390
        %v392 = vmul.f32 %v387, %v391
        %vm393 = vweird.f32 %v386
        %vm394 = vweird.f32 %v387
        %vm395 = vmor %vm393, %vm394
        %v396 = vsel %vm395, %v387, %v392
        %v397 = vstv %s379
        %v398 = vmul.f32 %v396, %v397
        %v399 = vmul.f32 %v380, %v398
        %v400 = vld [vmem:[%s306] sm:$0xff]
        %v401 = vmul.f32 %v400, %v400
        %v402 = vsel %vm382, %v401, 0.0
        %403 = vadd.xlane.f32.xlu0 %v402
        %v404 = vpop.xlane.xlu0 %403
        %v405 = vmax.f32 %v404, 1e-24
        %v406 = vrsqrt.pop %v405
        %v407 = vmul.f32 %v406, %v405
        %v408 = vmul.f32 %v407, %v406
        %v409 = vmul.f32 0.5, %v408
        %v410 = vsub.f32 1.5, %v409
        %v411 = vmul.f32 %v406, %v410
        %vm412 = vweird.f32 %v405
        %vm413 = vweird.f32 %v406
        %vm414 = vmor %vm412, %vm413
        %v415 = vsel %vm414, %v406, %v411
        %v416 = vmul.f32 %v400, %v415
        %v417 = vld [vmem:[%s316] sm:$0xff]
        %v418 = vmul.f32 %v417, %v417
        %v419 = vsel %vm382, %v418, 0.0
        %420 = vadd.xlane.f32.xlu0 %v419
        %v421 = vpop.xlane.xlu0 %420
        %v422 = vmax.f32 %v421, 1e-24
        %v423 = vrsqrt.pop %v422
        %v424 = vmul.f32 %v423, %v422
        %v425 = vmul.f32 %v424, %v423
        %v426 = vmul.f32 0.5, %v425
        %v427 = vsub.f32 1.5, %v426
        %v428 = vmul.f32 %v423, %v427
        %vm429 = vweird.f32 %v422
        %vm430 = vweird.f32 %v423
        %vm431 = vmor %vm429, %vm430
        %v432 = vsel %vm431, %v423, %v428
        %v433 = vmul.f32 %v417, %v432
        %v434 = vld [vmem:[%s326] sm:$0xff]
        %v435 = vmul.f32 %v434, %v434
        %v436 = vsel %vm382, %v435, 0.0
        %437 = vadd.xlane.f32.xlu0 %v436
        %v438 = vpop.xlane.xlu0 %437
        %v439 = vmax.f32 %v438, 1e-24
        %v440 = vrsqrt.pop %v439
        %v441 = vmul.f32 %v440, %v439
        %v442 = vmul.f32 %v441, %v440
        %v443 = vmul.f32 0.5, %v442
        %v444 = vsub.f32 1.5, %v443
        %v445 = vmul.f32 %v440, %v444
        %vm446 = vweird.f32 %v439
        %vm447 = vweird.f32 %v440
        %vm448 = vmor %vm446, %vm447
        %v449 = vsel %vm448, %v440, %v445
        %v450 = vmul.f32 %v449, %v397
        %v451 = vmul.f32 %v434, %v450
        %v452 = vpack.c.bf16 %v399, %v399
        %v453 = vpack.c.bf16 %v416, %v416
        %v455 = vsel %vm382, %v452, 0
        %v458 = vsel %vm382, %v453, 0
        %460 = vmatpush.bf16.xpose.msra.mxu0 0
        %461 = vmatpush.bf16.xpose.msra.mxu0 0
        %462 = vmatpush.bf16.xpose.msra.mxu0 0
        %463 = vmatpush.bf16.xpose.msra.mxu0 0
        %464 = vmatpush.bf16.xpose.msra.mxu0 0
        %465 = vmatpush.bf16.xpose.msra.mxu0 0
        %466 = vmatpush.bf16.xpose.msra.mxu0 0
        %467 = vmatpush.bf16.xpose.msra.mxu0 %v458
        %468 = vmatmul.bf16.gmra.mxu0 %v455
        %v469 = vpop.f32.mrf.mxu0
        %v470 = vadd.f32 0.0, %v469
        %v471 = vpop.f32.mrf.mxu0
        %472 = vdwg.mxu0
        %v473 = vpack.c.bf16 %v433, %v433
        %v474 = vpack.c.bf16 %v451, %v451
        %v476 = vsel %vm382, %v473, 0
        %v479 = vsel %vm382, %v474, 0
        %481 = vmatpush.bf16.xpose.msra.mxu0 0
        %482 = vmatpush.bf16.xpose.msra.mxu0 0
        %483 = vmatpush.bf16.xpose.msra.mxu0 0
        %484 = vmatpush.bf16.xpose.msra.mxu0 0
        %485 = vmatpush.bf16.xpose.msra.mxu0 0
        %486 = vmatpush.bf16.xpose.msra.mxu0 0
        %487 = vmatpush.bf16.xpose.msra.mxu0 0
        %488 = vmatpush.bf16.xpose.msra.mxu0 %v479
        %489 = vmatmul.bf16.gmra.mxu0 %v476
        %v490 = vpop.f32.mrf.mxu0
        %v491 = vadd.f32 0.0, %v490
        %v492 = vpop.f32.mrf.mxu0
        %493 = vdwg.mxu0
        %v494 = vld [vmem:[#allocation2] sm:$0xff]
        %vm495 = vcmask 64512
        %v496 = vsel %vm495, %v470, -inf
        %497 = vmax.xlane.f32.xlu0 %v496
        %v498 = vpop.xlane.xlu0 %497
        %v499 = vmax.f32 %v494, %v498
        %v500 = vld [vmem:[#allocation3] sm:$0xff]
        %v501 = vsub.f32 %v494, %v499
        %v502 = vmul.f32 %v501, 1.442695
        %v503 = vpow.pop %v502
        %v504 = vmul.f32 %v500, %v503
        %506 = vset.pattern.permute.xlu0 0
        %507 = vperm.xlu0 %506, %v499
        %v508 = vpop.permute.xlu0 %507
        %v510 = vsub.f32 %v470, %v508
        %v511 = vmul.f32 %v510, 1.442695
        %v512 = vpow.pop %v511
        %v513 = vsel %vm495, %v512, 0.0
        %514 = vadd.xlane.f32.xlu0 %v513
        %v515 = vpop.xlane.xlu0 %514
        %v516 = vadd.f32 %v504, %v515
        %vm517 = vcmask 7168
        %518 = vst.msk [vmem:[#allocation3] sm:$0xff] %vm517, %v516
        %519 = vst.msk [vmem:[#allocation2] sm:$0xff] %vm517, %v499
        %v520 = vld [vmem:[#allocation4] sm:$0xff]
        %v521 = vsel %vm495, %v491, -inf
        %522 = vmax.xlane.f32.xlu0 %v521
        %v523 = vpop.xlane.xlu0 %522
        %v524 = vmax.f32 %v520, %v523
        %v525 = vld [vmem:[#allocation5] sm:$0xff]
        %v526 = vsub.f32 %v520, %v524
        %v527 = vmul.f32 %v526, 1.442695
        %v528 = vpow.pop %v527
        %v529 = vmul.f32 %v525, %v528
        %531 = vset.pattern.permute.xlu0 0
        %532 = vperm.xlu0 %531, %v524
        %v533 = vpop.permute.xlu0 %532
        %v535 = vsub.f32 %v491, %v533
        %v536 = vmul.f32 %v535, 1.442695
        %v537 = vpow.pop %v536
        %v538 = vsel %vm495, %v537, 0.0
        %539 = vadd.xlane.f32.xlu0 %v538
        %v540 = vpop.xlane.xlu0 %539
        %v541 = vadd.f32 %v529, %v540
        %542 = vst.msk [vmem:[#allocation5] sm:$0xff] %vm517, %v541
        %543 = vst.msk [vmem:[#allocation4] sm:$0xff] %vm517, %v524
        %p544 = scmp.eq.s32.totalorder %s34, 1
        // Predicated region
        $region61: #{tpu_custom_call.1} parent=39 // pred_check
          %p545 = pneg %p544
        $region62: #{tpu_custom_call.1} parent=39 // pred_check_branch
          %547 = sbr.rel (%p545) target = $region64
        $region63: #{tpu_custom_call.1} parent=39 // pred_region
          %v548 = vld [vmem:[#allocation2] sm:$0xff]
          %v549 = vld [vmem:[#allocation3] sm:$0xff]
          %v550 = vlog2.pop %v549
          %v551 = vmul.f32 %v550, 0.6931472
          %v552 = vadd.f32 %v548, %v551
          %v553 = vld [vmem:[#allocation4] sm:$0xff]
          %v554 = vld [vmem:[#allocation5] sm:$0xff]
          %v555 = vlog2.pop %v554
          %v556 = vmul.f32 %v555, 0.6931472
          %v557 = vadd.f32 %v553, %v556
          %v558 = vmul.f32 %v399, %v433
          %v559 = vsel %vm382, %v558, 0.0
          %560 = vadd.xlane.f32.xlu0 %v559
          %v561 = vpop.xlane.xlu0 %560
          %v562 = vsub.f32 %v552, %v561
          %v563 = vsub.f32 %v557, %v561
          %v564 = vadd.f32 %v562, %v563
          %566 = vset.pattern.permute.xlu0 0
          %567 = vperm.xlu0 %566, %v564
          %v568 = vpop.permute.xlu0 %567
          %570 = vst [vmem:[%s368] sm:$0xff] %v568
        $region64: #{tpu_custom_call.1} parent=39 // pred_fallthru
          _
        %s571 = sand.u32 %s174, 1
        %s572 = scalar_lea.sflag [#allocation9], %s571
        %s573 = sand.u32 %s174, 1
        %s574 = smul.addr %s573, 8
        %s575 = scalar_lea.vmem [#allocation15], %s574
        // Predicated region
        $region65: #{tpu_custom_call.1} parent=39 // pred_check
          %p576 = pneg %p184
        $region66: #{tpu_custom_call.1} parent=39 // pred_check_branch
          %578 = sbr.rel (%p576) target = $region68
        $region67: #{tpu_custom_call.1} parent=39 // pred_region
          %580 = vsyncadd %s572, 0
          %s581 = smul.addr %s33, 8
          %s582 = scalar_lea.hbm %s5, %s581
          %s584 = sshll.u32 %s575, 4
          %s585 = int_to_ptr.vmem [resolvable:$true] %s584
          %s586 = sshll.u32 %s582, 4
          %s587 = int_to_ptr.hbm [resolvable:$true] %s586
          %589 = dma.vmem_to_hbm [thread:$0]  %s585, 128, %s587, %s572
        $region68: #{tpu_custom_call.1} parent=39 // pred_fallthru
          _
      $region40: #{tpu_custom_call.1} parent=5 // pred_fallthru
        _
      %p590 = scmp.le.s32.totalorder 2, %s24
      // Predicated region
      $region69: #{tpu_custom_call.1} parent=5 // pred_check
        %p591 = pneg %p590
      $region70: #{tpu_custom_call.1} parent=5 // pred_check_branch
        %593 = sbr.rel (%p591) target = $region72
      $region71: #{tpu_custom_call.1} parent=5 // pred_region
        %s594 = ssub.s32 %s24, 2
        // Predicated region
        $region73: #{tpu_custom_call.1} parent=71 // pred_check
          %p595 = pneg %p190
        $region74: #{tpu_custom_call.1} parent=71 // pred_check_branch
          %597 = sbr.rel (%p595) target = $region76
        $region75: #{tpu_custom_call.1} parent=71 // pred_region
          %s598 = sand.u32 %s175, 1
          %s599 = scalar_lea.sflag [#allocation9], %s598
          %s600 = sand.u32 %s175, 1
          %s601 = smul.addr %s600, 8
          %s602 = scalar_lea.vmem [#allocation15], %s601
          %604 = dma.done %s599, 128
        $region76: #{tpu_custom_call.1} parent=71 // pred_fallthru
          _
      $region72: #{tpu_custom_call.1} parent=5 // pred_fallthru
        _
    $region6: #{tpu_custom_call.1} parent=1 // loop_footer
      %s28 = sadd.s32 1, %s24
    $region7: #{tpu_custom_call.1} parent=1 // loop_footer_branch
      %23 = sbr.rel target = $region3
    $region8: #{tpu_custom_call.1} parent=1 // loop_exit
      _
    %605 = vsyncpa [#allocation8], 1
    %s606 = scalar_lea.sflag [#allocation8], 1
    %607 = vsyncpa %s606, 1
    %608 = vsyncpa [#allocation11], 1
    %s609 = scalar_lea.sflag [#allocation11], 1
    %610 = vsyncpa %s609, 1
    %611 = vsyncpa [#allocation14], 1
    %s612 = scalar_lea.sflag [#allocation14], 1
    %613 = vsyncpa %s612, 1
    %614 = vsyncpa [#allocation9], 1
    %s615 = scalar_lea.sflag [#allocation9], 1
    %616 = vsyncpa %s615, 1

</llo_original>
